<compile_context>
chip_gen: v5e
topology: v5e:2x2
jax: 0.10.0
libtpu: 0.0.40
codegen_flags: <defaults>
</compile_context>

<pallas_src>
import jax
import jax.numpy as jnp
from jax.experimental import pallas as pl
from jax.experimental.pallas import tpu as pltpu


# ----------------------------------------------------------------------------
# Kernels
# ----------------------------------------------------------------------------
def _mlp_resident_kernel(x_ref, wfc_ref, wproj_ref, o_ref):
    # x_ref:     (tm, dim)
    # wfc_ref:   (dim, hidden)   c_fc.weight.T   (resident in VMEM)
    # wproj_ref: (hidden, dim)   c_proj.weight.T (resident in VMEM)
    # o_ref:     (tm, dim)
    x = x_ref[...]
    wfc = wfc_ref[...].astype(x.dtype)      # no-op guard; real cast is in wrapper
    wproj = wproj_ref[...].astype(x.dtype)

    h = jnp.dot(x, wfc, preferred_element_type=jnp.float32)
    h = jnp.maximum(h, 0.0)
    h = h * h

    out = jnp.dot(h.astype(x.dtype), wproj, preferred_element_type=jnp.float32)
    o_ref[...] = out.astype(o_ref.dtype)


def _mlp_streaming_kernel(x_ref, wfc_ref, wproj_ref, o_ref, acc_ref):
    # x_ref:     (tm, dim)
    # wfc_ref:   (dim, tk)    columns [k*tk:(k+1)*tk] of c_fc.weight.T
    # wproj_ref: (tk, dim)    rows    [k*tk:(k+1)*tk] of c_proj.weight.T
    # o_ref:     (tm, dim)
    # acc_ref:   (tm, dim) f32 accumulator, carried across the hidden axis
    k = pl.program_id(1)

    x = x_ref[...]
    wfc = wfc_ref[...].astype(x.dtype)      # no-op guard
    wproj = wproj_ref[...].astype(x.dtype)

    h = jnp.dot(x, wfc, preferred_element_type=jnp.float32)
    h = jnp.maximum(h, 0.0)
    h = h * h

    partial = jnp.dot(h.astype(x.dtype), wproj, preferred_element_type=jnp.float32)

    @pl.when(k == 0)
    def _():
        acc_ref[...] = partial              # first tile: store, don't zero+add

    @pl.when(k > 0)
    def _():
        acc_ref[...] += partial

    @pl.when(k == pl.num_programs(1) - 1)
    def _():
        o_ref[...] = acc_ref[...].astype(o_ref.dtype)


# ----------------------------------------------------------------------------
# Wrapper
# ----------------------------------------------------------------------------
def _vmem_budget_bytes():
    """Generation-aware VMEM budget with ~15% headroom for compiler scratch."""
    cap = 64 * 1024 * 1024                  # conservative fallback (v7x per-TC)
    try:
        cap = int(pltpu.get_tpu_info().vmem_capacity_bytes)
    except Exception:
        pass
    return int(cap * 0.85)


def mlp_pallas(x, w_fc, w_proj, *, tm=768, tk=512):
    """Fused MLP forward.

    x:      (..., dim)
    w_fc:   (4*dim, dim)   PyTorch [out_features, in_features] layout
    w_proj: (dim, 4*dim)   PyTorch [out_features, in_features] layout
    """
    orig_shape = x.shape
    dim = orig_shape[-1]
    hidden, dim_fc = w_fc.shape
    assert dim_fc == dim and w_proj.shape == (dim, hidden)

    x2 = x.reshape(-1, dim)
    n = x2.shape[0]
    itm = x2.dtype.itemsize

    # One-time, in XLA: CastedLinear's weight.to(x.dtype) + transpose so the
    # kernel's matmuls contract the RHS leading dim (native (K, N) layout).
    wfc_t = w_fc.astype(x2.dtype).T         # (dim, hidden)
    wproj_t = w_proj.astype(x2.dtype).T     # (hidden, dim)

    budget = _vmem_budget_bytes()

    # --- token tile ----------------------------------------------------------
    n_pad8 = -(-n // 8) * 8                 # sublane multiple
    if n_pad8 <= tm:
        tm = n_pad8                         # small problems: one token tile

    def resident_vmem(tm_):
        return (2 * tm_ * dim * itm         # x tile (double buffered)
                + 2 * dim * hidden * itm    # wfc_t  (conservative 2x)
                + 2 * hidden * dim * itm    # wproj_t (conservative 2x)
                + 2 * tm_ * dim * itm       # output tile
                + tm_ * hidden * 4)         # f32 h intermediate

    def streaming_vmem(tm_, tk_):
        return (2 * tm_ * dim * itm         # x tile
                + 2 * dim * tk_ * itm       # wfc_t slab
                + 2 * tk_ * dim * itm       # wproj_t slab
                + 2 * tm_ * dim * itm       # output tile
                + tm_ * dim * 4             # f32 accumulator scratch
                + tm_ * tk_ * 4)            # f32 h intermediate

    use_resident = resident_vmem(tm) <= budget

    if use_resident:
        # ---- weight-resident fast path: no hidden grid axis -----------------
        n_pad = -(-n // tm) * tm
        if n_pad != n:
            x2 = jnp.pad(x2, ((0, n_pad - n), (0, 0)))   # zero rows -> zero out
        grid = (n_pad // tm,)
        weight_streams = 1
        in_specs = [
            pl.BlockSpec((tm, dim), lambda i: (i, 0)),          # x rows
            pl.BlockSpec((dim, hidden), lambda i: (0, 0)),      # resident weight
            pl.BlockSpec((hidden, dim), lambda i: (0, 0)),      # resident weight
        ]
        out_specs = pl.BlockSpec((tm, dim), lambda i: (i, 0))
        scratch = []
        kernel = _mlp_resident_kernel
        dims_sem = ("parallel",)
    else:
        # ---- streaming path: tile the hidden (reduction) axis ---------------
        tk = min(tk, hidden)
        tk = max(128, (tk // 128) * 128)                  # lane-aligned tile
        while streaming_vmem(tm, tk) > budget and tk > 128:
            tk = max(128, ((tk // 2) // 128) * 128)       # shrink tk first
        while streaming_vmem(tm, tk) > budget and tm > 128:
            tm = max(128, ((tm // 2) // 8) * 8)           # then shrink tm

        n_pad = -(-n // tm) * tm
        if n_pad != n:
            x2 = jnp.pad(x2, ((0, n_pad - n), (0, 0)))

        hidden_pad = -(-hidden // tk) * tk
        if hidden_pad != hidden:
            # zero hidden units: relu(0)^2 = 0 -> contribute nothing to output
            wfc_t = jnp.pad(wfc_t, ((0, 0), (0, hidden_pad - hidden)))
            wproj_t = jnp.pad(wproj_t, ((0, hidden_pad - hidden), (0, 0)))

        grid = (n_pad // tm, hidden_pad // tk)
        weight_streams = n_pad // tm
        in_specs = [
            pl.BlockSpec((tm, dim), lambda i, k: (i, 0)),       # x rows (held over k)
            pl.BlockSpec((dim, tk), lambda i, k: (0, k)),       # wfc_t columns
            pl.BlockSpec((tk, dim), lambda i, k: (k, 0)),       # wproj_t rows
        ]
        out_specs = pl.BlockSpec((tm, dim), lambda i, k: (i, 0))
        scratch = [pltpu.VMEM((tm, dim), jnp.float32)]
        kernel = _mlp_streaming_kernel
        dims_sem = ("parallel", "arbitrary")

    # --- advisory cost estimate (reflects actual weight re-streaming) --------
    w_bytes = (wfc_t.size + wproj_t.size) * itm
    cost = pl.CostEstimate(
        flops=4 * n_pad * dim * hidden,          # two matmuls, 2*M*N*K each
        transcendentals=0,
        bytes_accessed=(n_pad * dim * itm        # x in
                        + n_pad * dim * itm      # out
                        + weight_streams * w_bytes),
    )

    out = pl.pallas_call(
        kernel,
        out_shape=jax.ShapeDtypeStruct((n_pad, dim), x.dtype),
        grid_spec=pltpu.PrefetchScalarGridSpec(
            num_scalar_prefetch=0,
            grid=grid,
            in_specs=in_specs,
            out_specs=out_specs,
            scratch_shapes=scratch,
        ),
        compiler_params=pltpu.CompilerParams(
            dimension_semantics=dims_sem,
            vmem_limit_bytes=int(budget),
        ),
        cost_estimate=cost,
    )(x2, wfc_t, wproj_t)

    if n_pad != n:
        out = out[:n]
    return out.reshape(orig_shape)


# ----------------------------------------------------------------------------
# Self-test
# ----------------------------------------------------------------------------
if __name__ == "__main__":
    # Small shapes consistent with the module: batch=2, seq=8, dim=32.
    batch, seq, dim = 2, 8, 32
    hidden = 4 * dim

    key = jax.random.PRNGKey(0)
    kx, kfc, kproj = jax.random.split(key, 3)
    x = jax.random.normal(kx, (batch, seq, dim), dtype=jnp.float32)

    # PyTorch weight layout: [out_features, in_features].
    w_fc = jax.random.normal(kfc, (hidden, dim), dtype=jnp.float32) / jnp.sqrt(dim)
    w_proj_zero = jnp.zeros((dim, hidden), dtype=jnp.float32)       # module init
    w_proj_rand = jax.random.normal(kproj, (dim, hidden), dtype=jnp.float32) / jnp.sqrt(hidden)

    def ref(x, w_fc, w_proj):
        h = jnp.maximum(x @ w_fc.T, 0.0) ** 2
        return h @ w_proj.T

    # 1) module-default init (c_proj zeroed) — matches MLP.__init__.
    out0 = mlp_pallas(x, w_fc, w_proj_zero)
    jax.block_until_ready(out0)
    assert out0.shape == x.shape
    assert jnp.allclose(out0, ref(x, w_fc, w_proj_zero), atol=1e-5), "mismatch (zero proj)"

    # 2) non-trivial check with a random c_proj to exercise both matmuls.
    out1 = mlp_pallas(x, w_fc, w_proj_rand)
    jax.block_until_ready(out1)
    assert jnp.allclose(out1, ref(x, w_fc, w_proj_rand), atol=1e-4, rtol=1e-4), \
        "mismatch (random proj)"

    print("KERNEL_OK")
</pallas_src>

<mosaic_0001>
module attributes {stable_mosaic.version = 11 : i64} {
  func.func @_mlp_resident_kernel(%arg0: i32, %arg1: memref<16x32xf32, #tpu.memory_space<vmem>>, %arg2: memref<32x128xf32, #tpu.memory_space<vmem>>, %arg3: memref<128x32xf32, #tpu.memory_space<vmem>>, %arg4: memref<16x32xf32, #tpu.memory_space<vmem>>) attributes {dimension_semantics = [#tpu.dimension_semantics<parallel>], iteration_bounds = array<i64: 1>, scalar_prefetch = 0 : i64, scratch_operands = 0 : i64, tpu.core_type = #tpu.core_type<tc>, window_params = [{transform_indices = @transform_0, window_bounds = array<i64: 16, 32>}, {pipeline_mode = #tpu.pipeline_mode<synchronous>, transform_indices = @transform_1, window_bounds = array<i64: 32, 128>}, {pipeline_mode = #tpu.pipeline_mode<synchronous>, transform_indices = @transform_2, window_bounds = array<i64: 128, 32>}, {transform_indices = @transform_3, window_bounds = array<i64: 16, 32>}]} {
    %c0 = arith.constant 0 : index
    %c0_0 = arith.constant 0 : index
    %0 = vector.load %arg1[%c0, %c0_0] : memref<16x32xf32, #tpu.memory_space<vmem>>, vector<16x32xf32>
    %c0_1 = arith.constant 0 : index
    %c0_2 = arith.constant 0 : index
    %1 = vector.load %arg2[%c0_1, %c0_2] : memref<32x128xf32, #tpu.memory_space<vmem>>, vector<32x128xf32>
    %c0_3 = arith.constant 0 : index
    %c0_4 = arith.constant 0 : index
    %2 = vector.load %arg3[%c0_3, %c0_4] : memref<128x32xf32, #tpu.memory_space<vmem>>, vector<128x32xf32>
    %cst = arith.constant dense<0.000000e+00> : vector<16x128xf32>
    %3 = tpu.matmul %0, %1, %cst {dimension_numbers = #tpu.dot_dimension_numbers<[1], [0], [0], [1], [0, 0, 1, 1], [], []>} : vector<16x32xf32>, vector<32x128xf32>, vector<16x128xf32> -> vector<16x128xf32>
    %cst_5 = arith.constant 0.000000e+00 : f32
    %4 = vector.broadcast %cst_5 : f32 to vector<16x128xf32>
    %5 = arith.maximumf %3, %4 : vector<16x128xf32>
    %6 = arith.mulf %5, %5 : vector<16x128xf32>
    %cst_6 = arith.constant dense<0.000000e+00> : vector<16x32xf32>
    %7 = tpu.matmul %6, %2, %cst_6 {dimension_numbers = #tpu.dot_dimension_numbers<[1], [0], [0], [1], [0, 0, 1, 1], [], []>} : vector<16x128xf32>, vector<128x32xf32>, vector<16x32xf32> -> vector<16x32xf32>
    %c0_7 = arith.constant 0 : index
    %c0_8 = arith.constant 0 : index
    %8 = vector.load %arg4[%c0_7, %c0_8] : memref<16x32xf32, #tpu.memory_space<vmem>>, vector<16x32xf32>
    tpu.vector_store %arg4[%c0_7, %c0_8], %7 {strides = array<i32>} : memref<16x32xf32, #tpu.memory_space<vmem>>, vector<16x32xf32>,
    return
  }
  func.func @transform_0(%arg0: i32) -> (i32, i32) {
    %c0_i32 = arith.constant 0 : i32
    %c0_i32_0 = arith.constant 0 : i32
    return %arg0, %c0_i32 : i32, i32
  }
  func.func @transform_1(%arg0: i32) -> (i32, i32) {
    %c0_i32 = arith.constant 0 : i32
    %c0_i32_0 = arith.constant 0 : i32
    %c0_i32_1 = arith.constant 0 : i32
    return %c0_i32, %c0_i32_0 : i32, i32
  }
  func.func @transform_2(%arg0: i32) -> (i32, i32) {
    %c0_i32 = arith.constant 0 : i32
    %c0_i32_0 = arith.constant 0 : i32
    %c0_i32_1 = arith.constant 0 : i32
    return %c0_i32, %c0_i32_0 : i32, i32
  }
  func.func @transform_3(%arg0: i32) -> (i32, i32) {
    %c0_i32 = arith.constant 0 : i32
    %c0_i32_0 = arith.constant 0 : i32
    return %arg0, %c0_i32 : i32, i32
  }
}

</mosaic_0001>

<llo_original>
// kernel: tpu_custom_call.1
$region0: #{tpu_custom_call.1}
  #allocation0 [shape = 'u32[]', space=smem, size = 0x4, offset = 0x4, fixed_abs, tag = 'smem constant byte address 0x4 - core index']
  #allocation1 [shape = 'u32[72,128]{1,0:T(1,128)}', space=vmem, size = 0x9000, scoped, tag = 'internal scratch']
  %s0 = inlined_call_operand.vmem [shape: f32[16,32], index: 0, kind: input, shape index: {}]
  %s1 = inlined_call_operand.vmem [shape: f32[32,128], index: 1, kind: input, shape index: {}]
  %s2 = inlined_call_operand.vmem [shape: f32[128,32], index: 2, kind: input, shape index: {}]
  %s3 = inlined_call_operand.hbm [shape: f32[16,32], index: 3, kind: output, shape index: {}]
  %s4 = sld [smem:[#allocation0]]
  $region22: #{tpu_custom_call.1} parent=0
    _
  %s6 = ssub.s32 1, %s4
  %s7 = scalar_select 0, %s6, %s4
  $region1: #{tpu_custom_call.1} parent=0
    #allocation2 [shape = 'u8[8192]{0}', space=vmem, size = 0x2000, scoped, tag = 'output window, operand 0, single buffered']
    #allocation3 [shape = 's32[1]{0}', space=sflag, size = 0x4, scoped, tag = 'scoped memory for tpu_custom_call.1']
    %8 = vsyncpa [#allocation3], 0
    // Predicated region
    $region2: #{tpu_custom_call.1} parent=1 // pred_check
      _
    $region3: #{tpu_custom_call.1} parent=1 // pred_check_branch
      %10 = sbr.rel (0) target = $region5
    $region4: #{tpu_custom_call.1} parent=1 // pred_region
      _
    $region5: #{tpu_custom_call.1} parent=1 // pred_fallthru
      _
    // Predicated region
    $region6: #{tpu_custom_call.1} parent=1 // pred_check
      _
    $region7: #{tpu_custom_call.1} parent=1 // pred_check_branch
      %12 = sbr.rel (0) target = $region9
    $region8: #{tpu_custom_call.1} parent=1 // pred_region
      _
    $region9: #{tpu_custom_call.1} parent=1 // pred_fallthru
      _
    // Predicated region
    $region10: #{tpu_custom_call.1} parent=1 // pred_check
      _
    $region11: #{tpu_custom_call.1} parent=1 // pred_check_branch
      %14 = sbr.rel (0) target = $region13
    $region12: #{tpu_custom_call.1} parent=1 // pred_region
      _
    $region13: #{tpu_custom_call.1} parent=1 // pred_fallthru
      _
    %v15 = vld [vmem:[%s0] sm:$0xff]
    %v16 = vld [vmem:[%s0 + $0x8] sm:$0xff]
    %v17 = vld [vmem:[%s1] sm:$0xff]
    %v18 = vld [vmem:[%s1 + $0x8] sm:$0xff]
    %v19 = vld [vmem:[%s1 + $0x10] sm:$0xff]
    %v20 = vld [vmem:[%s1 + $0x18] sm:$0xff]
    %v21 = vld [vmem:[%s2] sm:$0xff]
    %v22 = vld [vmem:[%s2 + $0x8] sm:$0xff]
    %v23 = vld [vmem:[%s2 + $0x10] sm:$0xff]
    %v24 = vld [vmem:[%s2 + $0x18] sm:$0xff]
    %v25 = vld [vmem:[%s2 + $0x20] sm:$0xff]
    %v26 = vld [vmem:[%s2 + $0x28] sm:$0xff]
    %v27 = vld [vmem:[%s2 + $0x30] sm:$0xff]
    %v28 = vld [vmem:[%s2 + $0x38] sm:$0xff]
    %v29 = vld [vmem:[%s2 + $0x40] sm:$0xff]
    %v30 = vld [vmem:[%s2 + $0x48] sm:$0xff]
    %v31 = vld [vmem:[%s2 + $0x50] sm:$0xff]
    %v32 = vld [vmem:[%s2 + $0x58] sm:$0xff]
    %v33 = vld [vmem:[%s2 + $0x60] sm:$0xff]
    %v34 = vld [vmem:[%s2 + $0x68] sm:$0xff]
    %v35 = vld [vmem:[%s2 + $0x70] sm:$0xff]
    %v36 = vld [vmem:[%s2 + $0x78] sm:$0xff]
    %vm37 = vcmask 261120
    %v39 = vsel %vm37, %v15, 0
    %v42 = vsel %vm37, %v16, 0
    %44 = vmatpush.msra.mxu0 0.0
    %45 = vmatpush.msra.mxu0 0.0
    %46 = vmatpush.msra.mxu0 0.0
    %47 = vmatpush.msra.mxu0 0.0
    %48 = vmatpush.msra.mxu0 0.0
    %49 = vmatpush.msra.mxu0 0.0
    %50 = vmatpush.msra.mxu0 0.0
    %51 = vmatpush.msra.mxu0 0.0
    %52 = vmatpush.msra.mxu0 0.0
    %53 = vmatpush.msra.mxu0 0.0
    %54 = vmatpush.msra.mxu0 0.0
    %55 = vmatpush.msra.mxu0 0.0
    %56 = vmatpush.msra.mxu0 %v20
    %57 = vmatpush.msra.mxu0 %v19
    %58 = vmatpush.msra.mxu0 %v18
    %59 = vmatpush.msra.mxu0 %v17
    %60 = vmatmul.f32.gmra.mxu0 %v39
    %v61 = vpop.f32.mrf.mxu0
    %v62 = vadd.f32 0.0, %v61
    %63 = vmatmul.f32.gmra.mxu0 %v42
    %v64 = vpop.f32.mrf.mxu0
    %v65 = vadd.f32 0.0, %v64
    %66 = vdwg.mxu0
    %v67 = vmax.f32 %v62, 0.0
    %v68 = vmax.f32 %v65, 0.0
    %v69 = vmul.f32 %v67, %v67
    %v70 = vmul.f32 %v68, %v68
    %71 = vmatpush.msra.mxu0 %v36
    %72 = vmatpush.msra.mxu0 %v35
    %73 = vmatpush.msra.mxu0 %v34
    %74 = vmatpush.msra.mxu0 %v33
    %75 = vmatpush.msra.mxu0 %v32
    %76 = vmatpush.msra.mxu0 %v31
    %77 = vmatpush.msra.mxu0 %v30
    %78 = vmatpush.msra.mxu0 %v29
    %79 = vmatpush.msra.mxu0 %v28
    %80 = vmatpush.msra.mxu0 %v27
    %81 = vmatpush.msra.mxu0 %v26
    %82 = vmatpush.msra.mxu0 %v25
    %83 = vmatpush.msra.mxu0 %v24
    %84 = vmatpush.msra.mxu0 %v23
    %85 = vmatpush.msra.mxu0 %v22
    %86 = vmatpush.msra.mxu0 %v21
    %87 = vmatmul.f32.gmra.mxu0 %v69
    %v88 = vpop.f32.mrf.mxu0
    %v89 = vadd.f32 0.0, %v88
    %90 = vmatmul.f32.gmra.mxu0 %v70
    %v91 = vpop.f32.mrf.mxu0
    %v92 = vadd.f32 0.0, %v91
    %93 = vdwg.mxu0
    %94 = vst.msk [vmem:[#allocation2] sm:$0xff] %vm37, %v89
    %95 = vst.msk [vmem:[#allocation2 + $0x8] sm:$0xff] %vm37, %v92
    // Predicated region
    $region14: #{tpu_custom_call.1} parent=1 // pred_check
      _
    $region15: #{tpu_custom_call.1} parent=1 // pred_check_branch
      %97 = sbr.rel (0) target = $region17
    $region16: #{tpu_custom_call.1} parent=1 // pred_region
      %99 = vsyncadd [#allocation3], 0
      %s100 = sshll.u32 [#allocation2], 4
      %s101 = int_to_ptr.vmem [resolvable:$true] %s100
      %s102 = sshll.u32 %s3, 4
      %s103 = int_to_ptr.hbm [resolvable:$true] %s102
      %108 = dma.vmem_to_hbm [thread:$0]  %s101, 256, %s103, [#allocation3], 128, 128, 8
    $region17: #{tpu_custom_call.1} parent=1 // pred_fallthru
      _
    // Predicated region
    $region18: #{tpu_custom_call.1} parent=1 // pred_check
      _
    $region19: #{tpu_custom_call.1} parent=1 // pred_check_branch
      %110 = sbr.rel (0) target = $region21
    $region20: #{tpu_custom_call.1} parent=1 // pred_region
      %112 = dma.done [#allocation3], 256
    $region21: #{tpu_custom_call.1} parent=1 // pred_fallthru
      _
    %113 = vsyncpa [#allocation3], 1

</llo_original>
